<compile_context>
chip_gen: v7x
topology: tpu7x:2x2x1
jax: 0.10.0
libtpu: 0.0.40
codegen_flags: <defaults>
</compile_context>

<pallas_src>
import functools

import jax
import jax.numpy as jnp
from jax.experimental import pallas as pl
from jax.experimental.pallas import tpu as pltpu

BN_EPS = 1e-5  # PyTorch BatchNorm1d default


def _round_up(v, m):
    return (v + m - 1) // m * m


def _vmem_budget_bytes():
    """Generation-aware scoped-VMEM cap (v7x: 64 MiB phys, v5e/v6e: 128 MiB)."""
    cap = 64 * 1024 * 1024
    try:
        info = pltpu.get_tpu_info()
        cap = int(getattr(info, "vmem_capacity_bytes", cap))
    except Exception:
        pass
    return min((cap * 7) // 8, 100 * 1024 * 1024)


def _stage1_kernel(x_ref, w1_ref, h_ref, stats_ref):
    # h0 = x @ W1 (no bias): MXU, f32 accumulation.  Zero-padded batch rows and
    # zero-padded feature columns give exactly-zero rows/cols of h, so they
    # contribute nothing to the statistics -- no masking needed.
    h = jnp.dot(x_ref[...], w1_ref[...], preferred_element_type=jnp.float32)
    h_ref[...] = h.astype(h_ref.dtype)
    s = jnp.sum(h, axis=0, keepdims=True)
    sq = jnp.sum(h * h, axis=0, keepdims=True)
    # Per-tile partial statistics: row 0 = sum, row 1 = sum of squares,
    # rows 2..7 are zero padding so the (8, inner) output block is sublane-tiled.
    stats_ref[...] = jnp.concatenate(
        [s, sq, jnp.zeros((6, s.shape[1]), jnp.float32)], axis=0)


def _stage2_kernel(h_ref, scale_ref, shift_ref, w2_ref, b2_ref, o_ref):
    # Folded BN affine + ReLU, then the second Linear on the MXU.
    y = jnp.maximum(
        h_ref[...].astype(jnp.float32) * scale_ref[...] + shift_ref[...], 0.0)
    out = jnp.dot(y.astype(w2_ref.dtype), w2_ref[...],
                  preferred_element_type=jnp.float32)
    o_ref[...] = (out + b2_ref[...]).astype(o_ref.dtype)


@functools.partial(jax.jit, static_argnames=("tile_n", "compute_dtype"))
def moby_mlp(x, w1t, b1, gamma, beta, w2t, b2, *, tile_n=512,
             compute_dtype=jnp.bfloat16):
    """Forward pass of MoBYMLP(num_layers=2) as two fused Pallas kernels.

    Parameters are stored pre-transposed in (in, out) layout:
      x:   (N, in_dim)
      w1t: (in_dim, inner_dim)     b1, gamma, beta: (inner_dim,)
      w2t: (inner_dim, out_dim)    b2: (out_dim,)
    b1 is accepted for API parity but cancels out of the training-mode
    BatchNorm forward (per-feature constant shift), so it is not used.
    """
    del b1  # cancels in training-mode BN; see module docstring / TODO above.

    n, in_dim = x.shape
    inner_dim = w1t.shape[1]
    out_dim = w2t.shape[1]

    cdt = jnp.dtype(compute_dtype)
    cb = cdt.itemsize
    ob = jnp.dtype(x.dtype).itemsize

    # ---- lane/sublane-friendly padding & tile sizing -------------------------
    in_pad = _round_up(in_dim, 128)
    inner_pad = _round_up(inner_dim, 128)
    out_pad = _round_up(out_dim, 128)

    align = 16 if cb < 4 else 8            # bf16 sublane packing = 16 rows
    tile = _round_up(min(int(tile_n), _round_up(n, align)), align)

    budget = _vmem_budget_bytes()

    def _vmem_est(t):
        # double-buffered blocks + resident weights + one f32 temporary.
        e1 = (2 * t * in_pad * cb + 2 * in_pad * inner_pad * cb
              + 2 * t * inner_pad * cb + 2 * 8 * inner_pad * 4
              + t * inner_pad * 4)
        e2 = (2 * t * inner_pad * cb + 2 * inner_pad * out_pad * cb
              + 2 * t * out_pad * ob + 8 * inner_pad * 4 + 2 * out_pad * 4
              + t * inner_pad * 4)
        return max(e1, e2) + (2 << 20)

    while _vmem_est(tile) > budget and tile > align:
        tile = max(align, _round_up(tile // 2, align))

    n_pad = _round_up(n, tile)
    num_tiles = n_pad // tile
    vmem_limit = int(min(budget, max(32 << 20, _vmem_est(tile) * 3 // 2)))

    x_p = jnp.pad(x, ((0, n_pad - n), (0, in_pad - in_dim))).astype(cdt)
    w1_p = jnp.pad(w1t, ((0, in_pad - in_dim),
                         (0, inner_pad - inner_dim))).astype(cdt)
    w2_p = jnp.pad(w2t, ((0, inner_pad - inner_dim),
                         (0, out_pad - out_dim))).astype(cdt)
    g_p = jnp.pad(gamma, (0, inner_pad - inner_dim)).astype(jnp.float32)
    be_p = jnp.pad(beta, (0, inner_pad - inner_dim)).astype(jnp.float32)
    b2_p = jnp.pad(b2, (0, out_pad - out_dim)).reshape(1, out_pad).astype(jnp.float32)

    # ---- stage 1: h = x @ W1 + per-tile statistics ---------------------------
    flops1 = 2 * n_pad * in_pad * inner_pad
    bytes1 = (n_pad * in_pad * cb + in_pad * inner_pad * cb
              + n_pad * inner_pad * cb + num_tiles * 8 * inner_pad * 4)
    h_p, stats = pl.pallas_call(
        _stage1_kernel,
        out_shape=(jax.ShapeDtypeStruct((n_pad, inner_pad), cdt),
                   jax.ShapeDtypeStruct((num_tiles * 8, inner_pad), jnp.float32)),
        grid=(num_tiles,),
        in_specs=[
            pl.BlockSpec((tile, in_pad), lambda i: (i, 0)),       # x: streamed once
            pl.BlockSpec((in_pad, inner_pad), lambda i: (0, 0)),  # W1: resident
        ],
        out_specs=(
            pl.BlockSpec((tile, inner_pad), lambda i: (i, 0)),    # h cache
            pl.BlockSpec((8, inner_pad), lambda i: (i, 0)),       # per-tile stats
        ),
        compiler_params=pltpu.CompilerParams(
            dimension_semantics=("parallel",),
            vmem_limit_bytes=vmem_limit),
        cost_estimate=pl.CostEstimate(flops=int(flops1), transcendentals=0,
                                      bytes_accessed=int(bytes1)),
    )(x_p, w1_p)

    # ---- fold batch statistics into BN scale/shift (tiny XLA) ----------------
    stats = stats.reshape(num_tiles, 8, inner_pad)
    total_sum = jnp.sum(stats[:, 0, :], axis=0)
    total_sq = jnp.sum(stats[:, 1, :], axis=0)
    inv_n = 1.0 / float(n)
    mean0 = total_sum * inv_n                                   # mean of x@W1
    var = jnp.maximum(total_sq * inv_n - mean0 * mean0, 0.0)    # biased variance
    scale = g_p * jax.lax.rsqrt(var + BN_EPS)
    shift = be_p - mean0 * scale
    scale = scale.reshape(1, inner_pad)
    shift = shift.reshape(1, inner_pad)

    # ---- stage 2: relu(h*scale+shift) @ W2 + b2 -------------------------------
    flops2 = 2 * n_pad * inner_pad * out_pad + 3 * n_pad * inner_pad
    bytes2 = (n_pad * inner_pad * cb + inner_pad * out_pad * cb
              + n_pad * out_pad * ob + 2 * inner_pad * 4 + out_pad * 4)
    y_pad = pl.pallas_call(
        _stage2_kernel,
        out_shape=jax.ShapeDtypeStruct((n_pad, out_pad), x.dtype),
        grid=(num_tiles,),
        in_specs=[
            pl.BlockSpec((tile, inner_pad), lambda i: (i, 0)),    # cached h
            pl.BlockSpec((1, inner_pad), lambda i: (0, 0)),       # scale
            pl.BlockSpec((1, inner_pad), lambda i: (0, 0)),       # shift
            pl.BlockSpec((inner_pad, out_pad), lambda i: (0, 0)), # W2: resident
            pl.BlockSpec((1, out_pad), lambda i: (0, 0)),         # b2
        ],
        out_specs=pl.BlockSpec((tile, out_pad), lambda i: (i, 0)),
        compiler_params=pltpu.CompilerParams(
            dimension_semantics=("parallel",),
            vmem_limit_bytes=vmem_limit),
        cost_estimate=pl.CostEstimate(flops=int(flops2), transcendentals=0,
                                      bytes_accessed=int(bytes2)),
    )(h_p, scale, shift, w2_p, b2_p)

    return y_pad[:n, :out_dim]


def init_params(key, in_dim, inner_dim, out_dim):
    """PyTorch-default-style init, stored pre-transposed as (in, out)."""
    k1, k2, k3, k4 = jax.random.split(key, 4)
    bound1 = 1.0 / float(in_dim) ** 0.5
    w1t = jax.random.uniform(k1, (in_dim, inner_dim), jnp.float32, -bound1, bound1)
    b1 = jax.random.uniform(k2, (inner_dim,), jnp.float32, -bound1, bound1)
    gamma = jnp.ones((inner_dim,), jnp.float32)
    beta = jnp.zeros((inner_dim,), jnp.float32)
    bound2 = 1.0 / float(inner_dim) ** 0.5
    w2t = jax.random.uniform(k3, (inner_dim, out_dim), jnp.float32, -bound2, bound2)
    b2 = jax.random.uniform(k4, (out_dim,), jnp.float32, -bound2, bound2)
    return w1t, b1, gamma, beta, w2t, b2


def reference_forward(x, w1t, b1, gamma, beta, w2t, b2):
    """Pure-JAX reference matching the PyTorch forward (training-mode BN)."""
    h = x @ w1t + b1
    mean = jnp.mean(h, axis=0, keepdims=True)
    var = jnp.mean((h - mean) ** 2, axis=0, keepdims=True)
    h = (h - mean) / jnp.sqrt(var + BN_EPS)
    h = h * gamma + beta
    h = jnp.maximum(h, 0.0)
    return h @ w2t + b2


if __name__ == "__main__":
    key = jax.random.PRNGKey(0)
    kx1, kp1, kx2, kp2 = jax.random.split(key, 4)

    # ---- check 1: tiny shapes, single tile, f32 compute path -----------------
    n1, in1, inner1, out1 = 8, 32, 64, 32
    x1 = jax.random.normal(kx1, (n1, in1), jnp.float32)
    params1 = init_params(kp1, in1, inner1, out1)
    y1 = jax.block_until_ready(moby_mlp(x1, *params1, compute_dtype=jnp.float32))
    ref1 = reference_forward(x1, *params1)
    assert y1.shape == (n1, out1), y1.shape
    assert jnp.allclose(y1, ref1, atol=1e-2, rtol=1e-2), (
        float(jnp.max(jnp.abs(y1 - ref1))))

    # ---- check 2: multi-tile grid, batch/feature padding, bf16 MXU path ------
    n2, in2, inner2, out2 = 200, 96, 192, 80
    x2 = jax.random.normal(kx2, (n2, in2), jnp.float32)
    params2 = init_params(kp2, in2, inner2, out2)
    y2 = jax.block_until_ready(
        moby_mlp(x2, *params2, tile_n=64, compute_dtype=jnp.bfloat16))
    rb = lambda a: a.astype(jnp.bfloat16).astype(jnp.float32)
    w1t2, b12, g2, be2, w2t2, b22 = params2
    ref2 = reference_forward(rb(x2), rb(w1t2), b12, g2, be2, rb(w2t2), b22)
    assert y2.shape == (n2, out2), y2.shape
    assert jnp.allclose(y2, ref2, atol=3e-2, rtol=3e-2), (
        float(jnp.max(jnp.abs(y2 - ref2))))

    print("KERNEL_OK")
</pallas_src>

<mosaic_0001>
module attributes {stable_mosaic.version = 11 : i64} {
  func.func @_stage1_kernel(%arg0: i32, %arg1: memref<8x128xf32, #tpu.memory_space<vmem>>, %arg2: memref<128x128xf32, #tpu.memory_space<vmem>>, %arg3: memref<8x128xf32, #tpu.memory_space<vmem>>, %arg4: memref<8x128xf32, #tpu.memory_space<vmem>>) attributes {dimension_semantics = [#tpu.dimension_semantics<parallel>], iteration_bounds = array<i64: 1>, scalar_prefetch = 0 : i64, scratch_operands = 0 : i64, tpu.core_type = #tpu.core_type<tc>, window_params = [{transform_indices = @transform_0, window_bounds = array<i64: 8, 128>}, {pipeline_mode = #tpu.pipeline_mode<synchronous>, transform_indices = @transform_1, window_bounds = array<i64: 128, 128>}, {transform_indices = @transform_2, window_bounds = array<i64: 8, 128>}, {transform_indices = @transform_3, window_bounds = array<i64: 8, 128>}]} {
    %c0 = arith.constant 0 : index
    %c0_0 = arith.constant 0 : index
    %0 = vector.load %arg1[%c0, %c0_0] : memref<8x128xf32, #tpu.memory_space<vmem>>, vector<8x128xf32>
    %c0_1 = arith.constant 0 : index
    %c0_2 = arith.constant 0 : index
    %1 = vector.load %arg2[%c0_1, %c0_2] : memref<128x128xf32, #tpu.memory_space<vmem>>, vector<128x128xf32>
    %cst = arith.constant dense<0.000000e+00> : vector<8x128xf32>
    %2 = tpu.matmul %0, %1, %cst {dimension_numbers = #tpu.dot_dimension_numbers<[1], [0], [0], [1], [0, 0, 1, 1], [], []>} : vector<8x128xf32>, vector<128x128xf32>, vector<8x128xf32> -> vector<8x128xf32>
    %c0_3 = arith.constant 0 : index
    %c0_4 = arith.constant 0 : index
    %3 = vector.load %arg3[%c0_3, %c0_4] : memref<8x128xf32, #tpu.memory_space<vmem>>, vector<8x128xf32>
    tpu.vector_store %arg3[%c0_3, %c0_4], %2 {strides = array<i32>} : memref<8x128xf32, #tpu.memory_space<vmem>>, vector<8x128xf32>,
    %cst_5 = arith.constant dense<0.000000e+00> : vector<128xf32>
    %4 = vector.multi_reduction <add>, %2, %cst_5 [0] : vector<8x128xf32> to vector<128xf32>
    %5 = vector.shape_cast %4 : vector<128xf32> to vector<1x128xf32>
    %6 = arith.mulf %2, %2 : vector<8x128xf32>
    %cst_6 = arith.constant dense<0.000000e+00> : vector<128xf32>
    %7 = vector.multi_reduction <add>, %6, %cst_6 [0] : vector<8x128xf32> to vector<128xf32>
    %8 = vector.shape_cast %7 : vector<128xf32> to vector<1x128xf32>
    %cst_7 = arith.constant 0.000000e+00 : f32
    %9 = vector.broadcast %cst_7 : f32 to vector<6x128xf32>
    %10 = tpu.concatenate %5, %8, %9 in 0 : vector<1x128xf32>, vector<1x128xf32>, vector<6x128xf32> -> vector<8x128xf32>
    %c0_8 = arith.constant 0 : index
    %c0_9 = arith.constant 0 : index
    %11 = vector.load %arg4[%c0_8, %c0_9] : memref<8x128xf32, #tpu.memory_space<vmem>>, vector<8x128xf32>
    tpu.vector_store %arg4[%c0_8, %c0_9], %10 {strides = array<i32>} : memref<8x128xf32, #tpu.memory_space<vmem>>, vector<8x128xf32>,
    return
  }
  func.func @transform_0(%arg0: i32) -> (i32, i32) {
    %c0_i32 = arith.constant 0 : i32
    %c0_i32_0 = arith.constant 0 : i32
    return %arg0, %c0_i32 : i32, i32
  }
  func.func @transform_1(%arg0: i32) -> (i32, i32) {
    %c0_i32 = arith.constant 0 : i32
    %c0_i32_0 = arith.constant 0 : i32
    %c0_i32_1 = arith.constant 0 : i32
    return %c0_i32, %c0_i32_0 : i32, i32
  }
  func.func @transform_2(%arg0: i32) -> (i32, i32) {
    %c0_i32 = arith.constant 0 : i32
    %c0_i32_0 = arith.constant 0 : i32
    return %arg0, %c0_i32 : i32, i32
  }
  func.func @transform_3(%arg0: i32) -> (i32, i32) {
    %c0_i32 = arith.constant 0 : i32
    %c0_i32_0 = arith.constant 0 : i32
    return %arg0, %c0_i32 : i32, i32
  }
}

module attributes {stable_mosaic.version = 11 : i64} {
  func.func @_stage2_kernel(%arg0: i32, %arg1: memref<8x128xf32, #tpu.memory_space<vmem>>, %arg2: memref<1x128xf32, #tpu.memory_space<vmem>>, %arg3: memref<1x128xf32, #tpu.memory_space<vmem>>, %arg4: memref<128x128xf32, #tpu.memory_space<vmem>>, %arg5: memref<1x128xf32, #tpu.memory_space<vmem>>, %arg6: memref<8x128xf32, #tpu.memory_space<vmem>>) attributes {dimension_semantics = [#tpu.dimension_semantics<parallel>], iteration_bounds = array<i64: 1>, scalar_prefetch = 0 : i64, scratch_operands = 0 : i64, tpu.core_type = #tpu.core_type<tc>, window_params = [{transform_indices = @transform_0, window_bounds = array<i64: 8, 128>}, {pipeline_mode = #tpu.pipeline_mode<synchronous>, transform_indices = @transform_1, window_bounds = array<i64: 1, 128>}, {pipeline_mode = #tpu.pipeline_mode<synchronous>, transform_indices = @transform_2, window_bounds = array<i64: 1, 128>}, {pipeline_mode = #tpu.pipeline_mode<synchronous>, transform_indices = @transform_3, window_bounds = array<i64: 128, 128>}, {pipeline_mode = #tpu.pipeline_mode<synchronous>, transform_indices = @transform_4, window_bounds = array<i64: 1, 128>}, {transform_indices = @transform_5, window_bounds = array<i64: 8, 128>}]} {
    %c0 = arith.constant 0 : index
    %c0_0 = arith.constant 0 : index
    %0 = vector.load %arg1[%c0, %c0_0] : memref<8x128xf32, #tpu.memory_space<vmem>>, vector<8x128xf32>
    %c0_1 = arith.constant 0 : index
    %c0_2 = arith.constant 0 : index
    %1 = vector.load %arg2[%c0_1, %c0_2] : memref<1x128xf32, #tpu.memory_space<vmem>>, vector<1x128xf32>
    %2 = vector.broadcast %1 : vector<1x128xf32> to vector<8x128xf32>
    %3 = arith.mulf %0, %2 : vector<8x128xf32>
    %c0_3 = arith.constant 0 : index
    %c0_4 = arith.constant 0 : index
    %4 = vector.load %arg3[%c0_3, %c0_4] : memref<1x128xf32, #tpu.memory_space<vmem>>, vector<1x128xf32>
    %5 = vector.broadcast %4 : vector<1x128xf32> to vector<8x128xf32>
    %6 = arith.addf %3, %5 : vector<8x128xf32>
    %cst = arith.constant 0.000000e+00 : f32
    %7 = vector.broadcast %cst : f32 to vector<8x128xf32>
    %8 = arith.maximumf %6, %7 : vector<8x128xf32>
    %c0_5 = arith.constant 0 : index
    %c0_6 = arith.constant 0 : index
    %9 = vector.load %arg4[%c0_5, %c0_6] : memref<128x128xf32, #tpu.memory_space<vmem>>, vector<128x128xf32>
    %cst_7 = arith.constant dense<0.000000e+00> : vector<8x128xf32>
    %10 = tpu.matmul %8, %9, %cst_7 {dimension_numbers = #tpu.dot_dimension_numbers<[1], [0], [0], [1], [0, 0, 1, 1], [], []>} : vector<8x128xf32>, vector<128x128xf32>, vector<8x128xf32> -> vector<8x128xf32>
    %c0_8 = arith.constant 0 : index
    %c0_9 = arith.constant 0 : index
    %11 = vector.load %arg5[%c0_8, %c0_9] : memref<1x128xf32, #tpu.memory_space<vmem>>, vector<1x128xf32>
    %12 = vector.broadcast %11 : vector<1x128xf32> to vector<8x128xf32>
    %13 = arith.addf %10, %12 : vector<8x128xf32>
    %c0_10 = arith.constant 0 : index
    %c0_11 = arith.constant 0 : index
    %14 = vector.load %arg6[%c0_10, %c0_11] : memref<8x128xf32, #tpu.memory_space<vmem>>, vector<8x128xf32>
    tpu.vector_store %arg6[%c0_10, %c0_11], %13 {strides = array<i32>} : memref<8x128xf32, #tpu.memory_space<vmem>>, vector<8x128xf32>,
    return
  }
  func.func @transform_0(%arg0: i32) -> (i32, i32) {
    %c0_i32 = arith.constant 0 : i32
    %c0_i32_0 = arith.constant 0 : i32
    return %arg0, %c0_i32 : i32, i32
  }
  func.func @transform_1(%arg0: i32) -> (i32, i32) {
    %c0_i32 = arith.constant 0 : i32
    %c0_i32_0 = arith.constant 0 : i32
    %c0_i32_1 = arith.constant 0 : i32
    return %c0_i32, %c0_i32_0 : i32, i32
  }
  func.func @transform_2(%arg0: i32) -> (i32, i32) {
    %c0_i32 = arith.constant 0 : i32
    %c0_i32_0 = arith.constant 0 : i32
    %c0_i32_1 = arith.constant 0 : i32
    return %c0_i32, %c0_i32_0 : i32, i32
  }
  func.func @transform_3(%arg0: i32) -> (i32, i32) {
    %c0_i32 = arith.constant 0 : i32
    %c0_i32_0 = arith.constant 0 : i32
    %c0_i32_1 = arith.constant 0 : i32
    return %c0_i32, %c0_i32_0 : i32, i32
  }
  func.func @transform_4(%arg0: i32) -> (i32, i32) {
    %c0_i32 = arith.constant 0 : i32
    %c0_i32_0 = arith.constant 0 : i32
    %c0_i32_1 = arith.constant 0 : i32
    return %c0_i32, %c0_i32_0 : i32, i32
  }
  func.func @transform_5(%arg0: i32) -> (i32, i32) {
    %c0_i32 = arith.constant 0 : i32
    %c0_i32_0 = arith.constant 0 : i32
    return %arg0, %c0_i32 : i32, i32
  }
}

</mosaic_0001>

<llo_original>
// kernel: moby_mlp.2
$region0: #{moby_mlp.2}
  #allocation0 [shape = 'u32[]', space=smem, size = 0x4, offset = 0x4, fixed_abs, tag = 'smem constant byte address 0x4 - core index']
  #allocation1 [shape = 'u32[144,128]{1,0:T(1,128)}', space=vmem, size = 0x12000, scoped, tag = 'internal scratch']
  %s0 = inlined_call_operand.vmem [shape: f32[8,128], index: 0, kind: input, shape index: {}]
  %s1 = inlined_call_operand.vmem [shape: f32[128,128], index: 1, kind: input, shape index: {}]
  %s2 = inlined_call_operand.vmem [shape: f32[8,128], index: 2, kind: output, shape index: {0}]
  %s3 = inlined_call_operand.vmem [shape: f32[8,128], index: 3, kind: output, shape index: {1}]
  %4 = xla_tuple %s2, %s3
  %s5 = sld [smem:[#allocation0]]
  $region26: #{moby_mlp.2} parent=0
    _
  %s7 = ssub.s32 1, %s5
  %s8 = scalar_select 0, %s7, %s5
  // Predicated region
  $region2: #{moby_mlp.2} parent=0 // pred_check
    _
  $region3: #{moby_mlp.2} parent=0 // pred_check_branch
    %10 = sbr.rel (0) target = $region5
  $region4: #{moby_mlp.2} parent=0 // pred_region
    _
  $region5: #{moby_mlp.2} parent=0 // pred_fallthru
    _
  // Predicated region
  $region6: #{moby_mlp.2} parent=0 // pred_check
    _
  $region7: #{moby_mlp.2} parent=0 // pred_check_branch
    %12 = sbr.rel (0) target = $region9
  $region8: #{moby_mlp.2} parent=0 // pred_region
    _
  $region9: #{moby_mlp.2} parent=0 // pred_fallthru
    _
  %v13 = vld [vmem:[%s0] sm:$0xff]
  %v14 = vld [vmem:[%s1] sm:$0xff]
  %v15 = vld [vmem:[%s1 + $0x8] sm:$0xff]
  %v16 = vld [vmem:[%s1 + $0x10] sm:$0xff]
  %v17 = vld [vmem:[%s1 + $0x18] sm:$0xff]
  %v18 = vld [vmem:[%s1 + $0x20] sm:$0xff]
  %v19 = vld [vmem:[%s1 + $0x28] sm:$0xff]
  %v20 = vld [vmem:[%s1 + $0x30] sm:$0xff]
  %v21 = vld [vmem:[%s1 + $0x38] sm:$0xff]
  %v22 = vld [vmem:[%s1 + $0x40] sm:$0xff]
  %v23 = vld [vmem:[%s1 + $0x48] sm:$0xff]
  %v24 = vld [vmem:[%s1 + $0x50] sm:$0xff]
  %v25 = vld [vmem:[%s1 + $0x58] sm:$0xff]
  %v26 = vld [vmem:[%s1 + $0x60] sm:$0xff]
  %v27 = vld [vmem:[%s1 + $0x68] sm:$0xff]
  %v28 = vld [vmem:[%s1 + $0x70] sm:$0xff]
  %v29 = vld [vmem:[%s1 + $0x78] sm:$0xff]
  %30 = vmatprep.subr.mxu0 0.0
  %31 = vmatpush1.msra.mxu0 %v14
  %32 = vmatprep.subr.mxu0 0.0
  %33 = vmatpush1.msra.mxu0 %v15
  %34 = vmatprep.subr.mxu0 0.0
  %35 = vmatpush1.msra.mxu0 %v16
  %36 = vmatprep.subr.mxu0 0.0
  %37 = vmatpush1.msra.mxu0 %v17
  %38 = vmatprep.subr.mxu0 0.0
  %39 = vmatpush1.msra.mxu0 %v18
  %40 = vmatprep.subr.mxu0 0.0
  %41 = vmatpush1.msra.mxu0 %v19
  %42 = vmatprep.subr.mxu0 0.0
  %43 = vmatpush1.msra.mxu0 %v20
  %44 = vmatprep.subr.mxu0 0.0
  %45 = vmatpush1.msra.mxu0 %v21
  %46 = vmatprep.subr.mxu0 0.0
  %47 = vmatpush1.msra.mxu0 %v22
  %48 = vmatprep.subr.mxu0 0.0
  %49 = vmatpush1.msra.mxu0 %v23
  %50 = vmatprep.subr.mxu0 0.0
  %51 = vmatpush1.msra.mxu0 %v24
  %52 = vmatprep.subr.mxu0 0.0
  %53 = vmatpush1.msra.mxu0 %v25
  %54 = vmatprep.subr.mxu0 0.0
  %55 = vmatpush1.msra.mxu0 %v26
  %56 = vmatprep.subr.mxu0 0.0
  %57 = vmatpush1.msra.mxu0 %v27
  %58 = vmatprep.subr.mxu0 0.0
  %59 = vmatpush1.msra.mxu0 %v28
  %60 = vmatprep.subr.mxu0 0.0
  %61 = vmatpush1.msra.mxu0 %v29
  %62 = vmatprep.subr.mxu0 0.0
  %63 = vmatpush1.msra.mxu0 0.0
  %64 = vmatprep.subr.mxu0 0.0
  %65 = vmatpush1.msra.mxu0 0.0
  %66 = vmatprep.subr.mxu0 0.0
  %67 = vmatpush1.msra.mxu0 0.0
  %68 = vmatprep.subr.mxu0 0.0
  %69 = vmatpush1.msra.mxu0 0.0
  %70 = vmatprep.subr.mxu0 0.0
  %71 = vmatpush1.msra.mxu0 0.0
  %72 = vmatprep.subr.mxu0 0.0
  %73 = vmatpush1.msra.mxu0 0.0
  %74 = vmatprep.subr.mxu0 0.0
  %75 = vmatpush1.msra.mxu0 0.0
  %76 = vmatprep.subr.mxu0 0.0
  %77 = vmatpush1.msra.mxu0 0.0
  %78 = vmatprep.subr.mxu0 0.0
  %79 = vmatpush1.msra.mxu0 0.0
  %80 = vmatprep.subr.mxu0 0.0
  %81 = vmatpush1.msra.mxu0 0.0
  %82 = vmatprep.subr.mxu0 0.0
  %83 = vmatpush1.msra.mxu0 0.0
  %84 = vmatprep.subr.mxu0 0.0
  %85 = vmatpush1.msra.mxu0 0.0
  %86 = vmatprep.subr.mxu0 0.0
  %87 = vmatpush1.msra.mxu0 0.0
  %88 = vmatprep.subr.mxu0 0.0
  %89 = vmatpush1.msra.mxu0 0.0
  %90 = vmatprep.subr.mxu0 0.0
  %91 = vmatpush1.msra.mxu0 0.0
  %92 = vmatprep.subr.mxu0 0.0
  %93 = vmatpush1.msra.mxu0 0.0
  %94 = vmatprep.mubr.f32.mxu0 0.0
  %95 = vmatmul.mubr.f32.gmra.mrb[0].mxu0 %v13
  %v96 = vpop.f32.mrb[0].mxu0
  %v97 = vadd.f32 0.0, %v96
  %v98 = vpop.f32.mrb[0].mxu0
  %99 = vdwg.mxu0
  %100 = vst [vmem:[%s2] sm:$0xff] %v97
  %v101 = vrot.slane %v97, 4
  %v102 = vadd.f32 %v97, %v101
  %v103 = vrot.slane %v102, 2
  %v104 = vadd.f32 %v102, %v103
  %v105 = vrot.slane %v104, 1
  %v106 = vadd.f32 %v104, %v105
  %v107 = vmul.f32 %v97, %v97
  %v108 = vrot.slane %v107, 4
  %v109 = vadd.f32 %v107, %v108
  %v110 = vrot.slane %v109, 2
  %v111 = vadd.f32 %v109, %v110
  %v112 = vrot.slane %v111, 1
  %v113 = vadd.f32 %v111, %v112
  %vm114 = vcmask 1040384
  %v115 = vsel %vm114, %v106, %v113
  %vm116 = vcmask 1041408
  %v117 = vsel %vm116, %v115, 0.0
  %118 = vst [vmem:[%s3] sm:$0xff] %v117
  // Predicated region
  $region10: #{moby_mlp.2} parent=0 // pred_check
    _
  $region11: #{moby_mlp.2} parent=0 // pred_check_branch
    %120 = sbr.rel (0) target = $region13
  $region12: #{moby_mlp.2} parent=0 // pred_region
    _
  $region13: #{moby_mlp.2} parent=0 // pred_fallthru
    _
  // Predicated region
  $region14: #{moby_mlp.2} parent=0 // pred_check
    _
  $region15: #{moby_mlp.2} parent=0 // pred_check_branch
    %122 = sbr.rel (0) target = $region17
  $region16: #{moby_mlp.2} parent=0 // pred_region
    _
  $region17: #{moby_mlp.2} parent=0 // pred_fallthru
    _
  // Predicated region
  $region18: #{moby_mlp.2} parent=0 // pred_check
    _
  $region19: #{moby_mlp.2} parent=0 // pred_check_branch
    %124 = sbr.rel (0) target = $region21
  $region20: #{moby_mlp.2} parent=0 // pred_region
    _
  $region21: #{moby_mlp.2} parent=0 // pred_fallthru
    _
  // Predicated region
  $region22: #{moby_mlp.2} parent=0 // pred_check
    _
  $region23: #{moby_mlp.2} parent=0 // pred_check_branch
    %126 = sbr.rel (0) target = $region25
  $region24: #{moby_mlp.2} parent=0 // pred_region
    _
  $region25: #{moby_mlp.2} parent=0 // pred_fallthru
    _

// kernel: moby_mlp.3
$region0: #{moby_mlp.3}
  #allocation0 [shape = 'u32[]', space=smem, size = 0x4, offset = 0x4, fixed_abs, tag = 'smem constant byte address 0x4 - core index']
  #allocation1 [shape = 'u32[144,128]{1,0:T(1,128)}', space=vmem, size = 0x12000, scoped, tag = 'internal scratch']
  %s0 = inlined_call_operand.vmem [shape: f32[8,128], index: 0, kind: input, shape index: {}]
  %s1 = inlined_call_operand.vmem [shape: f32[1,128], index: 1, kind: input, shape index: {}]
  %s2 = inlined_call_operand.vmem [shape: f32[1,128], index: 2, kind: input, shape index: {}]
  %s3 = inlined_call_operand.vmem [shape: f32[128,128], index: 3, kind: input, shape index: {}]
  %s4 = inlined_call_operand.vmem [shape: f32[1,128], index: 4, kind: input, shape index: {}]
  %s5 = inlined_call_operand.hbm [shape: f32[8,128], index: 5, kind: output, shape index: {}]
  %s6 = sld [smem:[#allocation0]]
  $region30: #{moby_mlp.3} parent=0
    _
  %s8 = ssub.s32 1, %s6
  %s9 = scalar_select 0, %s8, %s6
  $region1: #{moby_mlp.3} parent=0
    #allocation2 [shape = 'u8[4096]{0}', space=vmem, size = 0x1000, scoped, tag = 'output window, operand 0, single buffered']
    #allocation3 [shape = 's32[1]{0}', space=sflag, size = 0x4, scoped, tag = 'scoped memory for moby_mlp.3']
    %10 = vsyncpa [#allocation3], 0
    // Predicated region
    $region2: #{moby_mlp.3} parent=1 // pred_check
      _
    $region3: #{moby_mlp.3} parent=1 // pred_check_branch
      %12 = sbr.rel (0) target = $region5
    $region4: #{moby_mlp.3} parent=1 // pred_region
      _
    $region5: #{moby_mlp.3} parent=1 // pred_fallthru
      _
    // Predicated region
    $region6: #{moby_mlp.3} parent=1 // pred_check
      _
    $region7: #{moby_mlp.3} parent=1 // pred_check_branch
      %14 = sbr.rel (0) target = $region9
    $region8: #{moby_mlp.3} parent=1 // pred_region
      _
    $region9: #{moby_mlp.3} parent=1 // pred_fallthru
      _
    // Predicated region
    $region10: #{moby_mlp.3} parent=1 // pred_check
      _
    $region11: #{moby_mlp.3} parent=1 // pred_check_branch
      %16 = sbr.rel (0) target = $region13
    $region12: #{moby_mlp.3} parent=1 // pred_region
      _
    $region13: #{moby_mlp.3} parent=1 // pred_fallthru
      _
    // Predicated region
    $region14: #{moby_mlp.3} parent=1 // pred_check
      _
    $region15: #{moby_mlp.3} parent=1 // pred_check_branch
      %18 = sbr.rel (0) target = $region17
    $region16: #{moby_mlp.3} parent=1 // pred_region
      _
    $region17: #{moby_mlp.3} parent=1 // pred_fallthru
      _
    // Predicated region
    $region18: #{moby_mlp.3} parent=1 // pred_check
      _
    $region19: #{moby_mlp.3} parent=1 // pred_check_branch
      %20 = sbr.rel (0) target = $region21
    $region20: #{moby_mlp.3} parent=1 // pred_region
      _
    $region21: #{moby_mlp.3} parent=1 // pred_fallthru
      _
    %v21 = vld [vmem:[%s0] sm:$0xff]
    %v22 = vld [vmem:[%s1] sm:$0x1]
    %v24 = vlaneseq
    %v25 = vshrl.u32 %v24, 7
    %v26 = vsub.s32 0, %v25
    %v27 = vrot.slane %v22, %v26
    %v29 = vmul.f32 %v21, %v27
    %v30 = vld [vmem:[%s2] sm:$0x1]
    %v32 = vlaneseq
    %v33 = vshrl.u32 %v32, 7
    %v34 = vsub.s32 0, %v33
    %v35 = vrot.slane %v30, %v34
    %v37 = vadd.f32 %v29, %v35
    %v38 = vmax.f32 %v37, 0.0
    %v39 = vld [vmem:[%s3] sm:$0xff]
    %v40 = vld [vmem:[%s3 + $0x8] sm:$0xff]
    %v41 = vld [vmem:[%s3 + $0x10] sm:$0xff]
    %v42 = vld [vmem:[%s3 + $0x18] sm:$0xff]
    %v43 = vld [vmem:[%s3 + $0x20] sm:$0xff]
    %v44 = vld [vmem:[%s3 + $0x28] sm:$0xff]
    %v45 = vld [vmem:[%s3 + $0x30] sm:$0xff]
    %v46 = vld [vmem:[%s3 + $0x38] sm:$0xff]
    %v47 = vld [vmem:[%s3 + $0x40] sm:$0xff]
    %v48 = vld [vmem:[%s3 + $0x48] sm:$0xff]
    %v49 = vld [vmem:[%s3 + $0x50] sm:$0xff]
    %v50 = vld [vmem:[%s3 + $0x58] sm:$0xff]
    %v51 = vld [vmem:[%s3 + $0x60] sm:$0xff]
    %v52 = vld [vmem:[%s3 + $0x68] sm:$0xff]
    %v53 = vld [vmem:[%s3 + $0x70] sm:$0xff]
    %v54 = vld [vmem:[%s3 + $0x78] sm:$0xff]
    %v55 = vld [vmem:[%s4] sm:$0x1]
    %v57 = vlaneseq
    %v58 = vshrl.u32 %v57, 7
    %v59 = vsub.s32 0, %v58
    %v60 = vrot.slane %v55, %v59
    %62 = vmatprep.subr.mxu0 0.0
    %63 = vmatpush1.msra.mxu0 %v39
    %64 = vmatprep.subr.mxu0 0.0
    %65 = vmatpush1.msra.mxu0 %v40
    %66 = vmatprep.subr.mxu0 0.0
    %67 = vmatpush1.msra.mxu0 %v41
    %68 = vmatprep.subr.mxu0 0.0
    %69 = vmatpush1.msra.mxu0 %v42
    %70 = vmatprep.subr.mxu0 0.0
    %71 = vmatpush1.msra.mxu0 %v43
    %72 = vmatprep.subr.mxu0 0.0
    %73 = vmatpush1.msra.mxu0 %v44
    %74 = vmatprep.subr.mxu0 0.0
    %75 = vmatpush1.msra.mxu0 %v45
    %76 = vmatprep.subr.mxu0 0.0
    %77 = vmatpush1.msra.mxu0 %v46
    %78 = vmatprep.subr.mxu0 0.0
    %79 = vmatpush1.msra.mxu0 %v47
    %80 = vmatprep.subr.mxu0 0.0
    %81 = vmatpush1.msra.mxu0 %v48
    %82 = vmatprep.subr.mxu0 0.0
    %83 = vmatpush1.msra.mxu0 %v49
    %84 = vmatprep.subr.mxu0 0.0
    %85 = vmatpush1.msra.mxu0 %v50
    %86 = vmatprep.subr.mxu0 0.0
    %87 = vmatpush1.msra.mxu0 %v51
    %88 = vmatprep.subr.mxu0 0.0
    %89 = vmatpush1.msra.mxu0 %v52
    %90 = vmatprep.subr.mxu0 0.0
    %91 = vmatpush1.msra.mxu0 %v53
    %92 = vmatprep.subr.mxu0 0.0
    %93 = vmatpush1.msra.mxu0 %v54
    %94 = vmatprep.subr.mxu0 0.0
    %95 = vmatpush1.msra.mxu0 0.0
    %96 = vmatprep.subr.mxu0 0.0
    %97 = vmatpush1.msra.mxu0 0.0
    %98 = vmatprep.subr.mxu0 0.0
    %99 = vmatpush1.msra.mxu0 0.0
    %100 = vmatprep.subr.mxu0 0.0
    %101 = vmatpush1.msra.mxu0 0.0
    %102 = vmatprep.subr.mxu0 0.0
    %103 = vmatpush1.msra.mxu0 0.0
    %104 = vmatprep.subr.mxu0 0.0
    %105 = vmatpush1.msra.mxu0 0.0
    %106 = vmatprep.subr.mxu0 0.0
    %107 = vmatpush1.msra.mxu0 0.0
    %108 = vmatprep.subr.mxu0 0.0
    %109 = vmatpush1.msra.mxu0 0.0
    %110 = vmatprep.subr.mxu0 0.0
    %111 = vmatpush1.msra.mxu0 0.0
    %112 = vmatprep.subr.mxu0 0.0
    %113 = vmatpush1.msra.mxu0 0.0
    %114 = vmatprep.subr.mxu0 0.0
    %115 = vmatpush1.msra.mxu0 0.0
    %116 = vmatprep.subr.mxu0 0.0
    %117 = vmatpush1.msra.mxu0 0.0
    %118 = vmatprep.subr.mxu0 0.0
    %119 = vmatpush1.msra.mxu0 0.0
    %120 = vmatprep.subr.mxu0 0.0
    %121 = vmatpush1.msra.mxu0 0.0
    %122 = vmatprep.subr.mxu0 0.0
    %123 = vmatpush1.msra.mxu0 0.0
    %124 = vmatprep.subr.mxu0 0.0
    %125 = vmatpush1.msra.mxu0 0.0
    %126 = vmatprep.mubr.f32.mxu0 0.0
    %127 = vmatmul.mubr.f32.gmra.mrb[0].mxu0 %v38
    %v128 = vpop.f32.mrb[0].mxu0
    %v129 = vadd.f32 %v60, %v128
    %v130 = vpop.f32.mrb[0].mxu0
    %131 = vdwg.mxu0
    %132 = vst [vmem:[#allocation2] sm:$0xff] %v129
    // Predicated region
    $region22: #{moby_mlp.3} parent=1 // pred_check
      _
    $region23: #{moby_mlp.3} parent=1 // pred_check_branch
      %134 = sbr.rel (0) target = $region25
    $region24: #{moby_mlp.3} parent=1 // pred_region
      %s136 = ssub.s32 128, 128
      %137 = vsyncadd [#allocation3], %s136
      %s139 = sshll.u32 [#allocation2], 4
      %s140 = int_to_ptr.vmem [resolvable:$true] %s139
      %142 = dma.vmem_to_hbm [thread:$0]  %s140, 128, %s5, [#allocation3]
    $region25: #{moby_mlp.3} parent=1 // pred_fallthru
      _
    // Predicated region
    $region26: #{moby_mlp.3} parent=1 // pred_check
      _
    $region27: #{moby_mlp.3} parent=1 // pred_check_branch
      %144 = sbr.rel (0) target = $region29
    $region28: #{moby_mlp.3} parent=1 // pred_region
      %145 = dma.done [#allocation3], 128
    $region29: #{moby_mlp.3} parent=1 // pred_fallthru
      _
    %146 = vsyncpa [#allocation3], 1

</llo_original>
